<compile_context>
chip_gen: v5e
topology: v5e:2x2
jax: 0.10.0
libtpu: 0.0.40
codegen_flags: <defaults>
</compile_context>

<pallas_src>
import functools

import jax
import jax.numpy as jnp
from jax.experimental import pallas as pl
from jax.experimental.pallas import tpu as pltpu


def _round_up(x, m):
    return ((x + m - 1) // m) * m


def _mlm_kernel(x_ref, wt_ref, lbl_ref, logits_ref, ploss_ref, *, n_tokens, block_rows):
    # x_ref:      (TN, H)  f32 hidden tile (cast to bf16 in-kernel, under the DMA)
    # wt_ref:     (H, V)   bf16 pre-transposed lm_head weight (resident, constant index)
    # lbl_ref:    (TN, 1)  i32 labels (-100 == ignore)
    # logits_ref: (TN, V)  f32 unpadded logits tile
    # ploss_ref:  (TN, 1)  f32 per-token CE contribution (0 for ignored / OOB rows)
    x = x_ref[...].astype(jnp.bfloat16)
    w = wt_ref[...]

    # lm_head: Linear(H, V, bias=False). bf16 MXU matmul, f32 accumulation.
    logits = jnp.dot(x, w, preferred_element_type=jnp.float32)          # (TN, V)
    logits_ref[...] = logits

    tn, v = logits.shape
    lbl = lbl_ref[...]                                                  # (TN, 1)
    col = jax.lax.broadcasted_iota(jnp.int32, (tn, v), 1)               # (TN, V)

    # cross_entropy with ignore_index=-100 (per-token; mean taken in wrapper).
    m = jnp.max(logits, axis=-1, keepdims=True)                         # (TN, 1)
    lse = m + jnp.log(jnp.sum(jnp.exp(logits - m), axis=-1, keepdims=True))
    tgt = jnp.sum(jnp.where(col == lbl, logits, 0.0), axis=-1, keepdims=True)

    # mask ignored labels and rows of a ragged (partial) last tile
    row = (pl.program_id(0) * block_rows
           + jax.lax.broadcasted_iota(jnp.int32, (tn, 1), 0))
    valid = (lbl != jnp.int32(-100)) & (row < n_tokens)
    ploss_ref[...] = jnp.where(valid, lse - tgt, 0.0)


def esm_for_masked_lm(hidden_flat, lm_head_w, labels_flat, *, tn=512):
    """ESMForMaskedLM head: logits = hidden @ W.T ; CE loss with ignore_index=-100.

    hidden_flat: (N, H) f32   backbone output flattened over (batch, seq)
    lm_head_w:   (V, H) f32   PyTorch-layout Linear weight (bias=False)
    labels_flat: (N,)   i32   (values outside [0, V) other than -100 are not checked)
    Returns (logits (N, V) f32, loss scalar f32).
    """
    N, H = hidden_flat.shape
    V = lm_head_w.shape[0]

    # token tile: multiple of 8 sublanes (f32 input), prefer 16-row alignment for the
    # bf16-cast operand, never larger than the (8-rounded) token count.
    n_cap = _round_up(N, 8)
    tn_eff = max(8, min(tn, n_cap))
    tn_eff = _round_up(tn_eff, 8)
    if tn_eff % 16 != 0 and _round_up(tn_eff, 16) <= n_cap:
        tn_eff = _round_up(tn_eff, 16)
    grid = pl.cdiv(N, tn_eff)

    # one-time layout plumbing (tiny): weight transpose+cast, labels as (N, 1) i32.
    w_t = lm_head_w.T.astype(jnp.bfloat16)                   # (H, V)
    lbl = labels_flat.astype(jnp.int32).reshape(N, 1)        # (N, 1)

    kernel = functools.partial(_mlm_kernel, n_tokens=N, block_rows=tn_eff)

    # VMEM budget: keep double-buffering alive; cap at 64 MiB so v7x is safe.
    vp_lanes = _round_up(V, 128)
    vmem_est = (2 * tn_eff * H * 4            # hidden tiles (f32, double-buffered)
                + 2 * tn_eff * vp_lanes * 4   # logits tiles (lane-padded in VMEM)
                + 2 * H * vp_lanes * 2        # resident weight pipeline buffers
                + 4 * tn_eff * 128 * 4)       # labels + ploss tiles (lane-padded)
    vmem_limit = int(min(64 * 1024 * 1024, max(32 * 1024 * 1024, 2 * vmem_est)))

    cost = pl.CostEstimate(
        flops=2 * N * H * V,
        transcendentals=N * V + N,
        bytes_accessed=N * H * 4 + H * V * 2 + N * V * 4 + N * 4 + N * 4,
    )

    logits, per_tok = pl.pallas_call(
        kernel,
        out_shape=(
            jax.ShapeDtypeStruct((N, V), jnp.float32),
            jax.ShapeDtypeStruct((N, 1), jnp.float32),
        ),
        grid_spec=pltpu.PrefetchScalarGridSpec(
            num_scalar_prefetch=0,
            grid=(grid,),
            in_specs=[
                pl.BlockSpec((tn_eff, H), lambda i: (i, 0)),   # f32 hidden tile
                pl.BlockSpec((H, V), lambda i: (0, 0)),        # resident bf16 weight
                pl.BlockSpec((tn_eff, 1), lambda i: (i, 0)),   # labels tile
            ],
            out_specs=(
                pl.BlockSpec((tn_eff, V), lambda i: (i, 0)),   # unpadded logits tile
                pl.BlockSpec((tn_eff, 1), lambda i: (i, 0)),   # per-token loss partials
            ),
        ),
        compiler_params=pltpu.CompilerParams(
            dimension_semantics=("parallel",),
            vmem_limit_bytes=vmem_limit,
        ),
        cost_estimate=cost,
    )(hidden_flat, w_t, lbl)

    # final reduction (cheap) outside the kernel; guard against zero valid labels
    count = jnp.sum((labels_flat != -100).astype(jnp.float32))
    loss = jnp.sum(per_tok) / jnp.maximum(count, 1.0)
    return logits, loss


def _reference(hidden_flat, lm_head_w, labels_flat):
    logits = hidden_flat @ lm_head_w.T
    lse = jax.scipy.special.logsumexp(logits, axis=-1)
    safe_lbl = jnp.where(labels_flat == -100, 0, labels_flat)
    tgt = jnp.take_along_axis(logits, safe_lbl[:, None], axis=-1)[:, 0]
    valid = labels_flat != -100
    per_tok = jnp.where(valid, lse - tgt, 0.0)
    return logits, jnp.sum(per_tok) / jnp.sum(valid.astype(jnp.float32))


if __name__ == "__main__":
    def run_case(key, B, S, H, V, tn):
        k_emb, k_w, k_ids, k_lbl, k_mask = jax.random.split(key, 5)

        embed_table = jax.random.normal(k_emb, (V, H), jnp.float32) * 0.02  # ESM backbone stub
        lm_head_w = jax.random.normal(k_w, (V, H), jnp.float32) * 0.02      # Linear(H, V, bias=False)

        input_ids = jax.random.randint(k_ids, (B, S), 0, V, jnp.int32)
        labels = jax.random.randint(k_lbl, (B, S), 0, V, jnp.int32)
        ignore = jax.random.bernoulli(k_mask, 0.3, (B, S))
        labels = jnp.where(ignore, -100, labels)
        labels = labels.at[0, 0].set(3)  # ensure at least one valid label

        # ESM backbone stub (glue, plain JAX): hidden = esm(input_ids)['logits']
        hidden = embed_table[input_ids]                  # (B, S, H)
        hidden_flat = hidden.reshape(B * S, H)
        labels_flat = labels.reshape(B * S)

        logits_flat, loss = esm_for_masked_lm(hidden_flat, lm_head_w, labels_flat, tn=tn)
        jax.block_until_ready((logits_flat, loss))

        # Cross-check against plain-JAX f32 reference (bf16 matmul => relaxed tolerance)
        ref_logits, ref_loss = _reference(hidden_flat, lm_head_w, labels_flat)
        assert jnp.allclose(logits_flat, ref_logits, atol=2e-4, rtol=2e-2), (
            float(jnp.max(jnp.abs(logits_flat - ref_logits))))
        assert jnp.allclose(loss, ref_loss, atol=2e-3, rtol=2e-3), (float(loss), float(ref_loss))
        return logits_flat.reshape(B, S, V), loss

    key = jax.random.PRNGKey(0)
    k1, k2 = jax.random.split(key)
    run_case(k1, B=2, S=8, H=32, V=33, tn=512)    # single-tile path (tile clamped to N)
    run_case(k2, B=3, S=20, H=32, V=33, tn=32)    # multi-tile grid + ragged last tile
    print("KERNEL_OK")
</pallas_src>

<mosaic_0001>
module attributes {stable_mosaic.version = 11 : i64} {
  func.func @_mlm_kernel(%arg0: i32, %arg1: memref<16x32xf32, #tpu.memory_space<vmem>>, %arg2: memref<32x33xbf16, #tpu.memory_space<vmem>>, %arg3: memref<16x1xi32, #tpu.memory_space<vmem>>, %arg4: memref<16x33xf32, #tpu.memory_space<vmem>>, %arg5: memref<16x1xf32, #tpu.memory_space<vmem>>) attributes {dimension_semantics = [#tpu.dimension_semantics<parallel>], iteration_bounds = array<i64: 1>, scalar_prefetch = 0 : i64, scratch_operands = 0 : i64, tpu.core_type = #tpu.core_type<tc>, window_params = [{transform_indices = @transform_0, window_bounds = array<i64: 16, 32>}, {pipeline_mode = #tpu.pipeline_mode<synchronous>, transform_indices = @transform_1, window_bounds = array<i64: 32, 33>}, {transform_indices = @transform_2, window_bounds = array<i64: 16, 1>}, {transform_indices = @transform_3, window_bounds = array<i64: 16, 33>}, {transform_indices = @transform_4, window_bounds = array<i64: 16, 1>}]} {
    %c0 = arith.constant 0 : index
    %c0_0 = arith.constant 0 : index
    %0 = vector.load %arg1[%c0, %c0_0] : memref<16x32xf32, #tpu.memory_space<vmem>>, vector<16x32xf32>
    %1 = arith.truncf %0 : vector<16x32xf32> to vector<16x32xbf16>
    %c0_1 = arith.constant 0 : index
    %c0_2 = arith.constant 0 : index
    %2 = vector.load %arg2[%c0_1, %c0_2] : memref<32x33xbf16, #tpu.memory_space<vmem>>, vector<32x33xbf16>
    %cst = arith.constant dense<0.000000e+00> : vector<16x33xf32>
    %3 = tpu.matmul %1, %2, %cst {dimension_numbers = #tpu.dot_dimension_numbers<[1], [0], [0], [1], [0, 0, 1, 1], [], []>} : vector<16x32xbf16>, vector<32x33xbf16>, vector<16x33xf32> -> vector<16x33xf32>
    %c0_3 = arith.constant 0 : index
    %c0_4 = arith.constant 0 : index
    %4 = vector.load %arg4[%c0_3, %c0_4] : memref<16x33xf32, #tpu.memory_space<vmem>>, vector<16x33xf32>
    tpu.vector_store %arg4[%c0_3, %c0_4], %3 {strides = array<i32>} : memref<16x33xf32, #tpu.memory_space<vmem>>, vector<16x33xf32>,
    %c0_5 = arith.constant 0 : index
    %c0_6 = arith.constant 0 : index
    %5 = vector.load %arg3[%c0_5, %c0_6] : memref<16x1xi32, #tpu.memory_space<vmem>>, vector<16x1xi32>
    %6 = tpu.iota {dimensions = array<i32: 1>} : vector<16x33xi32>
    %cst_7 = arith.constant dense<0xFF800000> : vector<16xf32>
    %7 = vector.multi_reduction <maximumf>, %3, %cst_7 [1] : vector<16x33xf32> to vector<16xf32>
    %8 = vector.shape_cast %7 : vector<16xf32> to vector<16x1xf32>
    %9 = vector.broadcast %8 : vector<16x1xf32> to vector<16x33xf32>
    %10 = arith.subf %3, %9 : vector<16x33xf32>
    %11 = math.exp %10 : vector<16x33xf32>
    %cst_8 = arith.constant dense<0.000000e+00> : vector<16xf32>
    %12 = vector.multi_reduction <add>, %11, %cst_8 [1] : vector<16x33xf32> to vector<16xf32>
    %13 = vector.shape_cast %12 : vector<16xf32> to vector<16x1xf32>
    %14 = math.log %13 : vector<16x1xf32>
    %15 = arith.addf %8, %14 : vector<16x1xf32>
    %16 = vector.broadcast %5 : vector<16x1xi32> to vector<16x33xi32>
    %17 = arith.cmpi eq, %6, %16 : vector<16x33xi32>
    %cst_9 = arith.constant 0.000000e+00 : f32
    %18 = vector.broadcast %cst_9 : f32 to vector<16x33xf32>
    %19 = arith.select %17, %3, %18 : vector<16x33xi1>, vector<16x33xf32>
    %cst_10 = arith.constant dense<0.000000e+00> : vector<16xf32>
    %20 = vector.multi_reduction <add>, %19, %cst_10 [1] : vector<16x33xf32> to vector<16xf32>
    %21 = vector.shape_cast %20 : vector<16xf32> to vector<16x1xf32>
    %c16_i32 = arith.constant 16 : i32
    %22 = arith.muli %arg0, %c16_i32 : i32
    %23 = tpu.iota {dimensions = array<i32: 0>} : vector<16x1xi32>
    %24 = vector.broadcast %22 : i32 to vector<16x1xi32>
    %25 = arith.addi %24, %23 : vector<16x1xi32>
    %c-100_i32 = arith.constant -100 : i32
    %26 = vector.broadcast %c-100_i32 : i32 to vector<16x1xi32>
    %27 = arith.cmpi ne, %5, %26 : vector<16x1xi32>
    %c16_i32_11 = arith.constant 16 : i32
    %28 = vector.broadcast %c16_i32_11 : i32 to vector<16x1xi32>
    %29 = arith.cmpi slt, %25, %28 : vector<16x1xi32>
    %30 = arith.andi %27, %29 : vector<16x1xi1>
    %31 = arith.subf %15, %21 : vector<16x1xf32>
    %cst_12 = arith.constant 0.000000e+00 : f32
    %32 = vector.broadcast %cst_12 : f32 to vector<16x1xf32>
    %33 = arith.select %30, %31, %32 : vector<16x1xi1>, vector<16x1xf32>
    %c0_13 = arith.constant 0 : index
    %c0_14 = arith.constant 0 : index
    %34 = vector.load %arg5[%c0_13, %c0_14] : memref<16x1xf32, #tpu.memory_space<vmem>>, vector<16x1xf32>
    tpu.vector_store %arg5[%c0_13, %c0_14], %33 {strides = array<i32>} : memref<16x1xf32, #tpu.memory_space<vmem>>, vector<16x1xf32>,
    return
  }
  func.func @transform_0(%arg0: i32) -> (i32, i32) {
    %c0_i32 = arith.constant 0 : i32
    %c0_i32_0 = arith.constant 0 : i32
    return %arg0, %c0_i32 : i32, i32
  }
  func.func @transform_1(%arg0: i32) -> (i32, i32) {
    %c0_i32 = arith.constant 0 : i32
    %c0_i32_0 = arith.constant 0 : i32
    %c0_i32_1 = arith.constant 0 : i32
    return %c0_i32, %c0_i32_0 : i32, i32
  }
  func.func @transform_2(%arg0: i32) -> (i32, i32) {
    %c0_i32 = arith.constant 0 : i32
    %c0_i32_0 = arith.constant 0 : i32
    return %arg0, %c0_i32 : i32, i32
  }
  func.func @transform_3(%arg0: i32) -> (i32, i32) {
    %c0_i32 = arith.constant 0 : i32
    %c0_i32_0 = arith.constant 0 : i32
    return %arg0, %c0_i32 : i32, i32
  }
  func.func @transform_4(%arg0: i32) -> (i32, i32) {
    %c0_i32 = arith.constant 0 : i32
    %c0_i32_0 = arith.constant 0 : i32
    return %arg0, %c0_i32 : i32, i32
  }
}

</mosaic_0001>

<llo_original>
// kernel: tpu_custom_call.1
$region0: #{tpu_custom_call.1}
  #allocation0 [shape = 'u32[]', space=smem, size = 0x4, offset = 0x4, fixed_abs, tag = 'smem constant byte address 0x4 - core index']
  #allocation1 [shape = 'u32[72,128]{1,0:T(1,128)}', space=vmem, size = 0x9000, scoped, tag = 'internal scratch']
  %s0 = inlined_call_operand.vmem [shape: f32[16,32], index: 0, kind: input, shape index: {}]
  %s1 = inlined_call_operand.hbm [shape: bf16[32,33], index: 1, kind: input, shape index: {}]
  %s2 = inlined_call_operand.vmem [shape: s32[16,1], index: 2, kind: input, shape index: {}]
  %s3 = inlined_call_operand.hbm [shape: f32[16,33], index: 3, kind: output, shape index: {0}]
  %s4 = inlined_call_operand.vmem [shape: f32[16,1], index: 4, kind: output, shape index: {1}]
  %5 = xla_tuple %s3, %s4
  %s6 = sld [smem:[#allocation0]]
  $region34: #{tpu_custom_call.1} parent=0
    _
  %s8 = ssub.s32 1, %s6
  %s9 = scalar_select 0, %s8, %s6
  $region1: #{tpu_custom_call.1} parent=0
    #allocation2 [shape = 'u8[8192]{0}', space=vmem, size = 0x2000, scoped, tag = 'input window, operand 1, single buffered']
    #allocation3 [shape = 's32[1]{0}', space=sflag, size = 0x4, scoped, tag = 'scoped memory for tpu_custom_call.1']
    #allocation4 [shape = 's32[1]{0}', space=sflag, size = 0x4, scoped, tag = 'scoped memory for tpu_custom_call.1']
    #allocation5 [shape = 'u8[8192]{0}', space=vmem, size = 0x2000, scoped, tag = 'output window, operand 0, single buffered']
    %10 = vsyncpa [#allocation3], 0
    %11 = vsyncpa [#allocation4], 0
    // Predicated region
    $region2: #{tpu_custom_call.1} parent=1 // pred_check
      _
    $region3: #{tpu_custom_call.1} parent=1 // pred_check_branch
      %13 = sbr.rel (0) target = $region5
    $region4: #{tpu_custom_call.1} parent=1 // pred_region
      _
    $region5: #{tpu_custom_call.1} parent=1 // pred_fallthru
      _
    // Predicated region
    $region6: #{tpu_custom_call.1} parent=1 // pred_check
      _
    $region7: #{tpu_custom_call.1} parent=1 // pred_check_branch
      %15 = sbr.rel (0) target = $region9
    $region8: #{tpu_custom_call.1} parent=1 // pred_region
      %17 = vsyncadd [#allocation3], 0
      %s18 = sshll.u32 %s1, 4
      %s19 = int_to_ptr.hbm [resolvable:$true] %s18
      %s20 = sshll.u32 [#allocation2], 4
      %s21 = int_to_ptr.vmem [resolvable:$true] %s20
      %26 = dma.hbm_to_vmem [thread:$0]  %s19, 256, %s21, [#allocation3], 64, 64, 4
    $region9: #{tpu_custom_call.1} parent=1 // pred_fallthru
      _
    // Predicated region
    $region10: #{tpu_custom_call.1} parent=1 // pred_check
      _
    $region11: #{tpu_custom_call.1} parent=1 // pred_check_branch
      %28 = sbr.rel (0) target = $region13
    $region12: #{tpu_custom_call.1} parent=1 // pred_region
      _
    $region13: #{tpu_custom_call.1} parent=1 // pred_fallthru
      _
    // Predicated region
    $region14: #{tpu_custom_call.1} parent=1 // pred_check
      _
    $region15: #{tpu_custom_call.1} parent=1 // pred_check_branch
      %30 = sbr.rel (0) target = $region17
    $region16: #{tpu_custom_call.1} parent=1 // pred_region
      %32 = dma.done [#allocation3], 256
    $region17: #{tpu_custom_call.1} parent=1 // pred_fallthru
      _
    %v34 = vld [vmem:[%s0] sm:$0xff]
    %v35 = vld [vmem:[%s0 + $0x8] sm:$0xff]
    %v36 = vpack.c.bf16 %v35, %v34
    %v37 = vld [vmem:[#allocation2] sm:$0xf]
    %v38 = vld [vmem:[#allocation2 + $0x4] sm:$0xf]
    %v39 = vld [vmem:[#allocation2 + $0x8] sm:$0xf]
    %v40 = vld [vmem:[#allocation2 + $0xc] sm:$0xf]
    %v45 = vunpack.c.l.b16 %v37
    %v46 = vunpack.c.l.b16 %v38
    %v47 = vunpack.c.l.b16 %v39
    %v48 = vunpack.c.l.b16 %v40
    %v49 = vpack.c.b16 %v46, %v45
    %v50 = vpack.c.b16 %v48, %v47
    %vm53 = vcmask 261120
    %v55 = vsel %vm53, %v36, 0
    %57 = vmatpush.bf16.msra.mxu0 0
    %58 = vmatpush.bf16.msra.mxu0 0
    %59 = vmatpush.bf16.msra.mxu0 0
    %60 = vmatpush.bf16.msra.mxu0 0
    %61 = vmatpush.bf16.msra.mxu0 0
    %62 = vmatpush.bf16.msra.mxu0 0
    %63 = vmatpush.bf16.msra.mxu0 %v50
    %64 = vmatpush.bf16.msra.mxu0 %v49
    %65 = vmatmul.bf16.gmra.mxu0 %v55
    %v66 = vpop.f32.mrf.mxu0
    %v67 = vadd.f32 0.0, %v66
    %v68 = vpop.f32.mrf.mxu0
    %v69 = vadd.f32 0.0, %v68
    %70 = vdwg.mxu0
    %vm71 = vcmask 269312
    %72 = vst.msk [vmem:[#allocation5] sm:$0xff] %vm71, %v67
    %73 = vst.msk [vmem:[#allocation5 + $0x8] sm:$0xff] %vm71, %v69
    %v74 = vld [vmem:[%s2] sm:$0xff]
    %v75 = vld [vmem:[%s2 + $0x8] sm:$0xff]
    %v76 = vlaneseq
    %v77 = vand.u32 %v76, 127
    %v78 = vsel %vm71, %v67, -inf
    %79 = vmax.xlane.f32.xlu0 %v78
    %v80 = vpop.xlane.xlu0 %79
    %v81 = vsel %vm71, %v69, -inf
    %82 = vmax.xlane.f32.xlu0 %v81
    %v83 = vpop.xlane.xlu0 %82
    %v84 = vsub.f32 %v67, %v80
    %v85 = vsub.f32 %v69, %v83
    %v86 = vmul.f32 %v84, 1.442695
    %v87 = vpow.pop %v86
    %v88 = vmul.f32 %v85, 1.442695
    %v89 = vpow.pop %v88
    %v90 = vsel %vm71, %v87, 0.0
    %91 = vadd.xlane.f32.xlu0 %v90
    %v92 = vpop.xlane.xlu0 %91
    %v93 = vsel %vm71, %v89, 0.0
    %94 = vadd.xlane.f32.xlu0 %v93
    %v95 = vpop.xlane.xlu0 %94
    %v96 = vlog2.pop %v92
    %v97 = vmul.f32 %v96, 0.6931472
    %v98 = vlog2.pop %v95
    %v99 = vmul.f32 %v98, 0.6931472
    %v100 = vadd.f32 %v80, %v97
    %v101 = vadd.f32 %v83, %v99
    %102 = vset.pattern.permute.xlu0 0
    %103 = vperm.xlu0 %102, %v74
    %v104 = vpop.permute.xlu0 %103
    %105 = vset.pattern.permute.xlu0 0
    %106 = vperm.xlu0 %105, %v75
    %v107 = vpop.permute.xlu0 %106
    %vm108 = vcmp.eq.s32.totalorder %v77, %v104
    %vm109 = vcmp.eq.s32.totalorder %v77, %v107
    %v110 = vsel %vm108, %v67, 0.0
    %v111 = vsel %vm109, %v69, 0.0
    %v112 = vsel %vm71, %v110, 0.0
    %113 = vadd.xlane.f32.xlu0 %v112
    %v114 = vpop.xlane.xlu0 %113
    %v115 = vsel %vm71, %v111, 0.0
    %116 = vadd.xlane.f32.xlu0 %v115
    %v117 = vpop.xlane.xlu0 %116
    %s118 = smul.u32 0, 16
    %v119 = vlaneseq
    %v120 = vshrl.u32 %v119, 7
    %v121 = vadd.s32 %v120, 8
    %v122 = vstv %s118
    %v123 = vadd.s32 %v122, %v120
    %v124 = vadd.s32 %v122, %v121
    %vm125 = vcmp.ne.s32.totalorder %v74, 4294967196
    %vm126 = vcmp.ne.s32.totalorder %v75, 4294967196
    %vm127 = vcmp.lt.s32.totalorder %v123, 16
    %vm128 = vcmp.lt.s32.totalorder %v124, 16
    %vm129 = vmand %vm125, %vm127
    %vm130 = vmand %vm126, %vm128
    %v131 = vsub.f32 %v100, %v114
    %v132 = vsub.f32 %v101, %v117
    %v133 = vsel %vm129, %v131, 0.0
    %v134 = vsel %vm130, %v132, 0.0
    %vm135 = vcmask 7168
    %136 = vst.msk [vmem:[%s4] sm:$0xff] %vm135, %v133
    %137 = vst.msk [vmem:[%s4 + $0x8] sm:$0xff] %vm135, %v134
    // Predicated region
    $region18: #{tpu_custom_call.1} parent=1 // pred_check
      _
    $region19: #{tpu_custom_call.1} parent=1 // pred_check_branch
      %139 = sbr.rel (0) target = $region21
    $region20: #{tpu_custom_call.1} parent=1 // pred_region
      %141 = vsyncadd [#allocation4], 0
      %s142 = sshll.u32 [#allocation5], 4
      %s143 = int_to_ptr.vmem [resolvable:$true] %s142
      %s144 = sshll.u32 %s3, 4
      %s145 = int_to_ptr.hbm [resolvable:$true] %s144
      %150 = dma.vmem_to_hbm [thread:$0]  %s143, 256, %s145, [#allocation4], 128, 128, 8
    $region21: #{tpu_custom_call.1} parent=1 // pred_fallthru
      _
    // Predicated region
    $region22: #{tpu_custom_call.1} parent=1 // pred_check
      _
    $region23: #{tpu_custom_call.1} parent=1 // pred_check_branch
      %152 = sbr.rel (0) target = $region25
    $region24: #{tpu_custom_call.1} parent=1 // pred_region
      _
    $region25: #{tpu_custom_call.1} parent=1 // pred_fallthru
      _
    // Predicated region
    $region26: #{tpu_custom_call.1} parent=1 // pred_check
      _
    $region27: #{tpu_custom_call.1} parent=1 // pred_check_branch
      %154 = sbr.rel (0) target = $region29
    $region28: #{tpu_custom_call.1} parent=1 // pred_region
      %156 = dma.done [#allocation4], 256
    $region29: #{tpu_custom_call.1} parent=1 // pred_fallthru
      _
    // Predicated region
    $region30: #{tpu_custom_call.1} parent=1 // pred_check
      _
    $region31: #{tpu_custom_call.1} parent=1 // pred_check_branch
      %158 = sbr.rel (0) target = $region33
    $region32: #{tpu_custom_call.1} parent=1 // pred_region
      _
    $region33: #{tpu_custom_call.1} parent=1 // pred_fallthru
      _
    %159 = vsyncpa [#allocation3], 1
    %160 = vsyncpa [#allocation4], 1

</llo_original>
